<compile_context>
chip_gen: v7x
topology: tpu7x:2x2x1
jax: 0.10.0
libtpu: 0.0.40
codegen_flags: <defaults>
</compile_context>

<pallas_src>
import jax
import jax.numpy as jnp
from jax.experimental import pallas as pl
from jax.experimental.pallas import tpu as pltpu

_LANE = 128
_SUBLANE = 16  # bf16 sublane packing


def _round_up(n, m):
    return ((n + m - 1) // m) * m


def _sample_generator_kernel(x_ref, w1_ref, b1_ref, w2_ref, b2_ref, out_ref):
    # X tile arrives unpadded/uncast ((tb, latent), x.dtype); cast to the
    # MXU-native weight dtype on the VPU (cheap, hidden under the DMAs).
    x = x_ref[...].astype(w1_ref.dtype)

    # Layer 1: bf16 MXU matmul, f32 accumulation; bias + ReLU in f32 (VPU).
    h = jnp.dot(x, w1_ref[...], preferred_element_type=jnp.float32)
    h = jnp.maximum(h + b1_ref[...], 0.0)

    # Layer 2: cast activations back to bf16 for the MXU; sigmoid in f32 (EUP).
    o = jnp.dot(h.astype(w2_ref.dtype), w2_ref[...],
                preferred_element_type=jnp.float32)
    o = jax.nn.sigmoid(o + b2_ref[...])

    out_ref[...] = o.astype(out_ref.dtype)


def prepare_sample_generator_params(w1, b1, w2, b2, compute_dtype=jnp.bfloat16):
    """Pad/cast parameters ONCE (hoisted out of the per-call path).

    w1: [latent, hidden], b1: [hidden], w2: [hidden, output], b2: [output].
    hidden/output are zero-padded to multiples of 128 lanes (lane-dense vregs,
    aligned MXU N); padding is value-preserving (padded hidden units are
    ReLU(0)=0 and see zero w2 rows; padded output columns are sliced away).
    The contraction dim `latent` is left unpadded — the MXU handles small K.
    """
    latent, hidden = w1.shape
    output = w2.shape[1]
    hid_p = _round_up(hidden, _LANE)
    out_p = _round_up(output, _LANE)

    w1_p = jnp.zeros((latent, hid_p), compute_dtype).at[:, :hidden].set(
        w1.astype(compute_dtype))
    b1_p = jnp.zeros((1, hid_p), jnp.float32).at[0, :hidden].set(
        b1.astype(jnp.float32))
    w2_p = jnp.zeros((hid_p, out_p), compute_dtype).at[:hidden, :output].set(
        w2.astype(compute_dtype))
    b2_p = jnp.zeros((1, out_p), jnp.float32).at[0, :output].set(
        b2.astype(jnp.float32))

    # Python ints are static metadata; if jitting the forward, close over them.
    return dict(w1=w1_p, b1=b1_p, w2=w2_p, b2=b2_p,
                latent=latent, hidden=hidden, output=output)


def sample_generator_forward(x, params, *, tile_b=1024, out_dtype=jnp.bfloat16):
    """x: [B, latent] -> [B, output] in `out_dtype` (bf16 by default: halves
    the dominant HBM write of this memory-bound kernel; pass out_dtype=x.dtype
    if exact f32 output dtype is required)."""
    w1_p, b1_p, w2_p, b2_p = params["w1"], params["b1"], params["w2"], params["b2"]
    latent, output = params["latent"], params["output"]
    B = x.shape[0]
    assert x.shape[1] == latent, "x feature dim must match w1 rows"
    hid_p = w1_p.shape[1]
    out_p = w2_p.shape[1]

    # --- batch tiling -------------------------------------------------------
    # Pad B to a multiple of 16 (bf16 sublane packing), then split into
    # near-equal tiles: padding stays O(sublane) per tile instead of up to a
    # whole tile.  Cap the tile so the grid has >= 2 steps whenever possible,
    # so the "parallel" axis can shard across both v7x TensorCores.
    B_pad16 = _round_up(max(B, _SUBLANE), _SUBLANE)
    tb = min(tile_b, max(_SUBLANE, _round_up(pl.cdiv(B_pad16, 2), _SUBLANE)))
    num_tiles = pl.cdiv(B_pad16, tb)
    tb = _round_up(pl.cdiv(B_pad16, num_tiles), _SUBLANE)
    B_pad = num_tiles * tb

    # Row-pad X only when needed (no lane padding, no dtype cast here: both
    # happen in-kernel, so the wrapper never makes an extra HBM pass over X).
    if B_pad != B:
        x_in = jnp.zeros((B_pad, latent), x.dtype).at[:B, :].set(x)
    else:
        x_in = x

    out_padded = pl.pallas_call(
        _sample_generator_kernel,
        out_shape=jax.ShapeDtypeStruct((B_pad, out_p), out_dtype),
        grid_spec=pl.GridSpec(
            grid=(num_tiles,),
            in_specs=[
                # X tile: last dim equals full array dim (legal), unpadded.
                pl.BlockSpec((tb, latent), lambda i: (i, 0)),
                pl.BlockSpec((latent, hid_p), lambda i: (0, 0)),  # w1 (resident)
                pl.BlockSpec((1, hid_p), lambda i: (0, 0)),       # b1 (resident)
                pl.BlockSpec((hid_p, out_p), lambda i: (0, 0)),   # w2 (resident)
                pl.BlockSpec((1, out_p), lambda i: (0, 0)),       # b2 (resident)
            ],
            out_specs=pl.BlockSpec((tb, out_p), lambda i: (i, 0)),
        ),
        compiler_params=pltpu.CompilerParams(
            # Batch tiles are independent -> shard grid steps across TCs (v7x).
            dimension_semantics=("parallel",),
        ),
    )(x_in, w1_p, b1_p, w2_p, b2_p)

    # Drop batch/lane padding (padded output cols hold sigmoid(0)=0.5 junk).
    if B_pad != B or out_p != output:
        return out_padded[:B, :output]
    return out_padded


if __name__ == "__main__":
    # Small shapes consistent with the module: latent=32, hidden=64, output=48, batch=8.
    latent_size, hidden_size, output_size = 32, 64, 48
    batch = 8

    key = jax.random.PRNGKey(0)
    k_x, k_w1, k_b1, k_w2, k_b2 = jax.random.split(key, 5)

    x = jax.random.normal(k_x, (batch, latent_size), dtype=jnp.float32)

    # Deterministic parameter init (uniform, roughly matching nn.Linear's scale).
    bound1 = 1.0 / (latent_size ** 0.5)
    w1 = jax.random.uniform(k_w1, (latent_size, hidden_size), jnp.float32,
                            -bound1, bound1)
    b1 = jax.random.uniform(k_b1, (hidden_size,), jnp.float32, -bound1, bound1)

    bound2 = 1.0 / (hidden_size ** 0.5)
    w2 = jax.random.uniform(k_w2, (hidden_size, output_size), jnp.float32,
                            -bound2, bound2)
    b2 = jax.random.uniform(k_b2, (output_size,), jnp.float32, -bound2, bound2)

    # One-time parameter padding/casting (not part of the per-call path).
    params = prepare_sample_generator_params(w1, b1, w2, b2)

    out = sample_generator_forward(x, params)
    out = jax.block_until_ready(out)

    # Reference check in plain JAX (full-f32 math as in the PyTorch module).
    ref = jax.nn.sigmoid(jnp.maximum(x @ w1 + b1, 0.0) @ w2 + b2)
    assert out.shape == (batch, output_size)
    # bf16 MXU inputs + bf16 output -> tolerance appropriate for bf16 mantissa.
    assert jnp.allclose(out.astype(jnp.float32), ref, atol=2e-2, rtol=0.0), \
        "mismatch vs reference"

    print("KERNEL_OK")
</pallas_src>

<mosaic_0001>
module attributes {stable_mosaic.version = 11 : i64} {
  func.func @_sample_generator_kernel(%arg0: i32, %arg1: memref<16x32xf32, #tpu.memory_space<vmem>>, %arg2: memref<32x128xbf16, #tpu.memory_space<vmem>>, %arg3: memref<1x128xf32, #tpu.memory_space<vmem>>, %arg4: memref<128x128xbf16, #tpu.memory_space<vmem>>, %arg5: memref<1x128xf32, #tpu.memory_space<vmem>>, %arg6: memref<16x128xbf16, #tpu.memory_space<vmem>>) attributes {dimension_semantics = [#tpu.dimension_semantics<parallel>], iteration_bounds = array<i64: 1>, scalar_prefetch = 0 : i64, scratch_operands = 0 : i64, tpu.core_type = #tpu.core_type<tc>, window_params = [{transform_indices = @transform_0, window_bounds = array<i64: 16, 32>}, {pipeline_mode = #tpu.pipeline_mode<synchronous>, transform_indices = @transform_1, window_bounds = array<i64: 32, 128>}, {pipeline_mode = #tpu.pipeline_mode<synchronous>, transform_indices = @transform_2, window_bounds = array<i64: 1, 128>}, {pipeline_mode = #tpu.pipeline_mode<synchronous>, transform_indices = @transform_3, window_bounds = array<i64: 128, 128>}, {pipeline_mode = #tpu.pipeline_mode<synchronous>, transform_indices = @transform_4, window_bounds = array<i64: 1, 128>}, {transform_indices = @transform_5, window_bounds = array<i64: 16, 128>}]} {
    %c0 = arith.constant 0 : index
    %c0_0 = arith.constant 0 : index
    %0 = vector.load %arg1[%c0, %c0_0] : memref<16x32xf32, #tpu.memory_space<vmem>>, vector<16x32xf32>
    %1 = arith.truncf %0 : vector<16x32xf32> to vector<16x32xbf16>
    %c0_1 = arith.constant 0 : index
    %c0_2 = arith.constant 0 : index
    %2 = vector.load %arg2[%c0_1, %c0_2] : memref<32x128xbf16, #tpu.memory_space<vmem>>, vector<32x128xbf16>
    %cst = arith.constant dense<0.000000e+00> : vector<16x128xf32>
    %3 = tpu.matmul %1, %2, %cst {dimension_numbers = #tpu.dot_dimension_numbers<[1], [0], [0], [1], [0, 0, 1, 1], [], []>} : vector<16x32xbf16>, vector<32x128xbf16>, vector<16x128xf32> -> vector<16x128xf32>
    %c0_3 = arith.constant 0 : index
    %c0_4 = arith.constant 0 : index
    %4 = vector.load %arg3[%c0_3, %c0_4] : memref<1x128xf32, #tpu.memory_space<vmem>>, vector<1x128xf32>
    %5 = vector.broadcast %4 : vector<1x128xf32> to vector<16x128xf32>
    %6 = arith.addf %3, %5 : vector<16x128xf32>
    %cst_5 = arith.constant 0.000000e+00 : f32
    %7 = vector.broadcast %cst_5 : f32 to vector<16x128xf32>
    %8 = arith.maximumf %6, %7 : vector<16x128xf32>
    %9 = arith.truncf %8 : vector<16x128xf32> to vector<16x128xbf16>
    %c0_6 = arith.constant 0 : index
    %c0_7 = arith.constant 0 : index
    %10 = vector.load %arg4[%c0_6, %c0_7] : memref<128x128xbf16, #tpu.memory_space<vmem>>, vector<128x128xbf16>
    %cst_8 = arith.constant dense<0.000000e+00> : vector<16x128xf32>
    %11 = tpu.matmul %9, %10, %cst_8 {dimension_numbers = #tpu.dot_dimension_numbers<[1], [0], [0], [1], [0, 0, 1, 1], [], []>} : vector<16x128xbf16>, vector<128x128xbf16>, vector<16x128xf32> -> vector<16x128xf32>
    %c0_9 = arith.constant 0 : index
    %c0_10 = arith.constant 0 : index
    %12 = vector.load %arg5[%c0_9, %c0_10] : memref<1x128xf32, #tpu.memory_space<vmem>>, vector<1x128xf32>
    %13 = vector.broadcast %12 : vector<1x128xf32> to vector<16x128xf32>
    %14 = arith.addf %11, %13 : vector<16x128xf32>
    %15 = arith.negf %14 : vector<16x128xf32>
    %16 = math.exp %15 : vector<16x128xf32>
    %cst_11 = arith.constant 1.000000e+00 : f32
    %17 = vector.broadcast %cst_11 : f32 to vector<16x128xf32>
    %18 = arith.addf %17, %16 : vector<16x128xf32>
    %19 = arith.divf %17, %18 : vector<16x128xf32>
    %20 = arith.truncf %19 : vector<16x128xf32> to vector<16x128xbf16>
    %c0_12 = arith.constant 0 : index
    %c0_13 = arith.constant 0 : index
    %21 = vector.load %arg6[%c0_12, %c0_13] : memref<16x128xbf16, #tpu.memory_space<vmem>>, vector<16x128xbf16>
    tpu.vector_store %arg6[%c0_12, %c0_13], %20 {strides = array<i32>} : memref<16x128xbf16, #tpu.memory_space<vmem>>, vector<16x128xbf16>,
    return
  }
  func.func @transform_0(%arg0: i32) -> (i32, i32) {
    %c0_i32 = arith.constant 0 : i32
    %c0_i32_0 = arith.constant 0 : i32
    return %arg0, %c0_i32 : i32, i32
  }
  func.func @transform_1(%arg0: i32) -> (i32, i32) {
    %c0_i32 = arith.constant 0 : i32
    %c0_i32_0 = arith.constant 0 : i32
    %c0_i32_1 = arith.constant 0 : i32
    return %c0_i32, %c0_i32_0 : i32, i32
  }
  func.func @transform_2(%arg0: i32) -> (i32, i32) {
    %c0_i32 = arith.constant 0 : i32
    %c0_i32_0 = arith.constant 0 : i32
    %c0_i32_1 = arith.constant 0 : i32
    return %c0_i32, %c0_i32_0 : i32, i32
  }
  func.func @transform_3(%arg0: i32) -> (i32, i32) {
    %c0_i32 = arith.constant 0 : i32
    %c0_i32_0 = arith.constant 0 : i32
    %c0_i32_1 = arith.constant 0 : i32
    return %c0_i32, %c0_i32_0 : i32, i32
  }
  func.func @transform_4(%arg0: i32) -> (i32, i32) {
    %c0_i32 = arith.constant 0 : i32
    %c0_i32_0 = arith.constant 0 : i32
    %c0_i32_1 = arith.constant 0 : i32
    return %c0_i32, %c0_i32_0 : i32, i32
  }
  func.func @transform_5(%arg0: i32) -> (i32, i32) {
    %c0_i32 = arith.constant 0 : i32
    %c0_i32_0 = arith.constant 0 : i32
    return %arg0, %c0_i32 : i32, i32
  }
}

</mosaic_0001>

<llo_original>
// kernel: tpu_custom_call.1
$region0: #{tpu_custom_call.1}
  #allocation0 [shape = 'u32[]', space=smem, size = 0x4, offset = 0x4, fixed_abs, tag = 'smem constant byte address 0x4 - core index']
  #allocation1 [shape = 'u32[144,128]{1,0:T(1,128)}', space=vmem, size = 0x12000, scoped, tag = 'internal scratch']
  %s0 = inlined_call_operand.hbm [shape: f32[16,32], index: 0, kind: input, shape index: {}]
  %s1 = inlined_call_operand.hbm [shape: bf16[32,128], index: 1, kind: input, shape index: {}]
  %s2 = inlined_call_operand.vmem [shape: f32[1,128], index: 2, kind: input, shape index: {}]
  %s3 = inlined_call_operand.hbm [shape: bf16[128,128], index: 3, kind: input, shape index: {}]
  %s4 = inlined_call_operand.vmem [shape: f32[1,128], index: 4, kind: input, shape index: {}]
  %s5 = inlined_call_operand.hbm [shape: bf16[16,128], index: 5, kind: output, shape index: {}]
  %s6 = sld [smem:[#allocation0]]
  $region42: #{tpu_custom_call.1} parent=0
    _
  %s8 = ssub.s32 1, %s6
  %s9 = scalar_select 0, %s8, %s6
  $region1: #{tpu_custom_call.1} parent=0
    #allocation2 [shape = 'u8[8192]{0}', space=vmem, size = 0x2000, scoped, tag = 'input window, operand 0, single buffered']
    #allocation3 [shape = 's32[1]{0}', space=sflag, size = 0x4, scoped, tag = 'scoped memory for tpu_custom_call.1']
    #allocation4 [shape = 's32[1]{0}', space=sflag, size = 0x4, scoped, tag = 'scoped memory for tpu_custom_call.1']
    #allocation5 [shape = 'u8[8192]{0}', space=vmem, size = 0x2000, scoped, tag = 'input window, operand 1, single buffered']
    #allocation6 [shape = 's32[1]{0}', space=sflag, size = 0x4, scoped, tag = 'scoped memory for tpu_custom_call.1']
    #allocation7 [shape = 'u8[32768]{0}', space=vmem, size = 0x8000, scoped, tag = 'input window, operand 3, single buffered']
    #allocation8 [shape = 'u8[4096]{0}', space=vmem, size = 0x1000, scoped, tag = 'output window, operand 0, single buffered']
    %10 = vsyncpa [#allocation3], 0
    %11 = vsyncpa [#allocation6], 0
    %12 = vsyncpa [#allocation4], 0
    // Predicated region
    $region2: #{tpu_custom_call.1} parent=1 // pred_check
      _
    $region3: #{tpu_custom_call.1} parent=1 // pred_check_branch
      %14 = sbr.rel (0) target = $region5
    $region4: #{tpu_custom_call.1} parent=1 // pred_region
      %s16 = ssub.s32 256, 256
      %17 = vsyncadd [#allocation3], %s16
      %s18 = sshll.u32 [#allocation2], 4
      %s19 = int_to_ptr.vmem [resolvable:$true] %s18
      %24 = dma.hbm_to_vmem [thread:$0]  %s0, 256, %s19, [#allocation3], 128, 128, 8
    $region5: #{tpu_custom_call.1} parent=1 // pred_fallthru
      _
    // Predicated region
    $region6: #{tpu_custom_call.1} parent=1 // pred_check
      _
    $region7: #{tpu_custom_call.1} parent=1 // pred_check_branch
      %26 = sbr.rel (0) target = $region9
    $region8: #{tpu_custom_call.1} parent=1 // pred_region
      %s28 = ssub.s32 256, 256
      %29 = vsyncadd [#allocation6], %s28
      %s30 = sshll.u32 [#allocation5], 4
      %s31 = int_to_ptr.vmem [resolvable:$true] %s30
      %36 = dma.hbm_to_vmem [thread:$0]  %s1, 256, %s31, [#allocation6], 64, 64, 4
    $region9: #{tpu_custom_call.1} parent=1 // pred_fallthru
      _
    // Predicated region
    $region10: #{tpu_custom_call.1} parent=1 // pred_check
      _
    $region11: #{tpu_custom_call.1} parent=1 // pred_check_branch
      %38 = sbr.rel (0) target = $region13
    $region12: #{tpu_custom_call.1} parent=1 // pred_region
      _
    $region13: #{tpu_custom_call.1} parent=1 // pred_fallthru
      _
    // Predicated region
    $region14: #{tpu_custom_call.1} parent=1 // pred_check
      _
    $region15: #{tpu_custom_call.1} parent=1 // pred_check_branch
      %40 = sbr.rel (0) target = $region17
    $region16: #{tpu_custom_call.1} parent=1 // pred_region
      %s42 = ssub.s32 1024, 1024
      %43 = vsyncadd [#allocation6], %s42
      %s44 = sshll.u32 [#allocation7], 4
      %s45 = int_to_ptr.vmem [resolvable:$true] %s44
      %50 = dma.hbm_to_vmem [thread:$0]  %s3, 1024, %s45, [#allocation6], 64, 64, 4
    $region17: #{tpu_custom_call.1} parent=1 // pred_fallthru
      _
    // Predicated region
    $region18: #{tpu_custom_call.1} parent=1 // pred_check
      _
    $region19: #{tpu_custom_call.1} parent=1 // pred_check_branch
      %52 = sbr.rel (0) target = $region21
    $region20: #{tpu_custom_call.1} parent=1 // pred_region
      _
    $region21: #{tpu_custom_call.1} parent=1 // pred_fallthru
      _
    // Predicated region
    $region22: #{tpu_custom_call.1} parent=1 // pred_check
      _
    $region23: #{tpu_custom_call.1} parent=1 // pred_check_branch
      %54 = sbr.rel (0) target = $region25
    $region24: #{tpu_custom_call.1} parent=1 // pred_region
      %55 = dma.done [#allocation3], 256
    $region25: #{tpu_custom_call.1} parent=1 // pred_fallthru
      _
    // Predicated region
    $region26: #{tpu_custom_call.1} parent=1 // pred_check
      _
    $region27: #{tpu_custom_call.1} parent=1 // pred_check_branch
      %57 = sbr.rel (0) target = $region29
    $region28: #{tpu_custom_call.1} parent=1 // pred_region
      %58 = dma.done [#allocation6], 256
    $region29: #{tpu_custom_call.1} parent=1 // pred_fallthru
      _
    // Predicated region
    $region30: #{tpu_custom_call.1} parent=1 // pred_check
      _
    $region31: #{tpu_custom_call.1} parent=1 // pred_check_branch
      %60 = sbr.rel (0) target = $region33
    $region32: #{tpu_custom_call.1} parent=1 // pred_region
      %61 = dma.done [#allocation6], 1024
    $region33: #{tpu_custom_call.1} parent=1 // pred_fallthru
      _
    %v63 = vld [vmem:[#allocation2] sm:$0xff]
    %v64 = vld [vmem:[#allocation2 + $0x8] sm:$0xff]
    %v65 = vpack.c.bf16 %v64, %v63
    %v66 = vld [vmem:[#allocation5] sm:$0xf]
    %v67 = vld [vmem:[#allocation5 + $0x4] sm:$0xf]
    %v68 = vld [vmem:[#allocation5 + $0x8] sm:$0xf]
    %v69 = vld [vmem:[#allocation5 + $0xc] sm:$0xf]
    %v70 = vld [vmem:[%s2] sm:$0x1]
    %v72 = vlaneseq
    %v73 = vshrl.u32 %v72, 7
    %v74 = vsub.s32 0, %v73
    %v75 = vrot.slane %v70, %v74
    %v81 = vunpack.c.l.b16 %v66
    %v82 = vunpack.c.l.b16 %v67
    %v83 = vunpack.c.l.b16 %v68
    %v84 = vunpack.c.l.b16 %v69
    %v85 = vpack.c.b16 %v82, %v81
    %v86 = vpack.c.b16 %v84, %v83
    %vm89 = vcmask 261120
    %v91 = vsel %vm89, %v65, 0
    %93 = vmatprep.subr.bf16.mxu0 0
    %94 = vmatpush1.bf16.msra.mxu0 %v85
    %95 = vmatprep.subr.bf16.mxu0 0
    %96 = vmatpush1.bf16.msra.mxu0 %v86
    %97 = vmatprep.subr.bf16.mxu0 0
    %98 = vmatpush1.bf16.msra.mxu0 0
    %99 = vmatprep.subr.bf16.mxu0 0
    %100 = vmatpush1.bf16.msra.mxu0 0
    %101 = vmatprep.subr.bf16.mxu0 0
    %102 = vmatpush1.bf16.msra.mxu0 0
    %103 = vmatprep.subr.bf16.mxu0 0
    %104 = vmatpush1.bf16.msra.mxu0 0
    %105 = vmatprep.subr.bf16.mxu0 0
    %106 = vmatpush1.bf16.msra.mxu0 0
    %107 = vmatprep.subr.bf16.mxu0 0
    %108 = vmatpush1.bf16.msra.mxu0 0
    %109 = vmatprep.subr.bf16.mxu0 0
    %110 = vmatpush1.bf16.msra.mxu0 0
    %111 = vmatprep.subr.bf16.mxu0 0
    %112 = vmatpush1.bf16.msra.mxu0 0
    %113 = vmatprep.subr.bf16.mxu0 0
    %114 = vmatpush1.bf16.msra.mxu0 0
    %115 = vmatprep.subr.bf16.mxu0 0
    %116 = vmatpush1.bf16.msra.mxu0 0
    %117 = vmatprep.subr.bf16.mxu0 0
    %118 = vmatpush1.bf16.msra.mxu0 0
    %119 = vmatprep.subr.bf16.mxu0 0
    %120 = vmatpush1.bf16.msra.mxu0 0
    %121 = vmatprep.subr.bf16.mxu0 0
    %122 = vmatpush1.bf16.msra.mxu0 0
    %123 = vmatprep.subr.bf16.mxu0 0
    %124 = vmatpush1.bf16.msra.mxu0 0
    %125 = vmatprep.mubr.bf16.mxu0 0
    %126 = vmatmul.mubr.bf16.gmra.mrb[0].mxu0 %v91
    %v127 = vpop.f32.mrb[0].mxu0
    %v128 = vadd.f32 %v75, %v127
    %v129 = vpop.f32.mrb[0].mxu0
    %v130 = vpop.f32.mrb[0].mxu0
    %v131 = vadd.f32 %v75, %v130
    %v132 = vpop.f32.mrb[0].mxu0
    %133 = vdwg.mxu0
    %v134 = vmax.f32 %v128, 0.0
    %v135 = vmax.f32 %v131, 0.0
    %v136 = vpack.c.bf16 %v135, %v134
    %v137 = vld [vmem:[#allocation7] sm:$0xf]
    %v138 = vld [vmem:[#allocation7 + $0x4] sm:$0xf]
    %v139 = vld [vmem:[#allocation7 + $0x8] sm:$0xf]
    %v140 = vld [vmem:[#allocation7 + $0xc] sm:$0xf]
    %v141 = vld [vmem:[#allocation7 + $0x10] sm:$0xf]
    %v142 = vld [vmem:[#allocation7 + $0x14] sm:$0xf]
    %v143 = vld [vmem:[#allocation7 + $0x18] sm:$0xf]
    %v144 = vld [vmem:[#allocation7 + $0x1c] sm:$0xf]
    %v145 = vld [vmem:[#allocation7 + $0x20] sm:$0xf]
    %v146 = vld [vmem:[#allocation7 + $0x24] sm:$0xf]
    %v147 = vld [vmem:[#allocation7 + $0x28] sm:$0xf]
    %v148 = vld [vmem:[#allocation7 + $0x2c] sm:$0xf]
    %v149 = vld [vmem:[#allocation7 + $0x30] sm:$0xf]
    %v150 = vld [vmem:[#allocation7 + $0x34] sm:$0xf]
    %v151 = vld [vmem:[#allocation7 + $0x38] sm:$0xf]
    %v152 = vld [vmem:[#allocation7 + $0x3c] sm:$0xf]
    %v153 = vld [vmem:[%s4] sm:$0x1]
    %v155 = vlaneseq
    %v156 = vshrl.u32 %v155, 7
    %v157 = vsub.s32 0, %v156
    %v158 = vrot.slane %v153, %v157
    %v176 = vunpack.c.l.b16 %v137
    %v177 = vunpack.c.l.b16 %v138
    %v178 = vunpack.c.l.b16 %v139
    %v179 = vunpack.c.l.b16 %v140
    %v180 = vunpack.c.l.b16 %v141
    %v181 = vunpack.c.l.b16 %v142
    %v182 = vunpack.c.l.b16 %v143
    %v183 = vunpack.c.l.b16 %v144
    %v184 = vunpack.c.l.b16 %v145
    %v185 = vunpack.c.l.b16 %v146
    %v186 = vunpack.c.l.b16 %v147
    %v187 = vunpack.c.l.b16 %v148
    %v188 = vunpack.c.l.b16 %v149
    %v189 = vunpack.c.l.b16 %v150
    %v190 = vunpack.c.l.b16 %v151
    %v191 = vunpack.c.l.b16 %v152
    %v192 = vpack.c.b16 %v177, %v176
    %v193 = vpack.c.b16 %v179, %v178
    %v194 = vpack.c.b16 %v181, %v180
    %v195 = vpack.c.b16 %v183, %v182
    %v196 = vpack.c.b16 %v185, %v184
    %v197 = vpack.c.b16 %v187, %v186
    %v198 = vpack.c.b16 %v189, %v188
    %v199 = vpack.c.b16 %v191, %v190
    %208 = vmatprep.subr.bf16.mxu0 0
    %209 = vmatpush1.bf16.msra.mxu0 %v192
    %210 = vmatprep.subr.bf16.mxu0 0
    %211 = vmatpush1.bf16.msra.mxu0 %v193
    %212 = vmatprep.subr.bf16.mxu0 0
    %213 = vmatpush1.bf16.msra.mxu0 %v194
    %214 = vmatprep.subr.bf16.mxu0 0
    %215 = vmatpush1.bf16.msra.mxu0 %v195
    %216 = vmatprep.subr.bf16.mxu0 0
    %217 = vmatpush1.bf16.msra.mxu0 %v196
    %218 = vmatprep.subr.bf16.mxu0 0
    %219 = vmatpush1.bf16.msra.mxu0 %v197
    %220 = vmatprep.subr.bf16.mxu0 0
    %221 = vmatpush1.bf16.msra.mxu0 %v198
    %222 = vmatprep.subr.bf16.mxu0 0
    %223 = vmatpush1.bf16.msra.mxu0 %v199
    %224 = vmatprep.subr.bf16.mxu0 0
    %225 = vmatpush1.bf16.msra.mxu0 0
    %226 = vmatprep.subr.bf16.mxu0 0
    %227 = vmatpush1.bf16.msra.mxu0 0
    %228 = vmatprep.subr.bf16.mxu0 0
    %229 = vmatpush1.bf16.msra.mxu0 0
    %230 = vmatprep.subr.bf16.mxu0 0
    %231 = vmatpush1.bf16.msra.mxu0 0
    %232 = vmatprep.subr.bf16.mxu0 0
    %233 = vmatpush1.bf16.msra.mxu0 0
    %234 = vmatprep.subr.bf16.mxu0 0
    %235 = vmatpush1.bf16.msra.mxu0 0
    %236 = vmatprep.subr.bf16.mxu0 0
    %237 = vmatpush1.bf16.msra.mxu0 0
    %238 = vmatprep.subr.bf16.mxu0 0
    %239 = vmatpush1.bf16.msra.mxu0 0
    %240 = vmatprep.mubr.bf16.mxu0 0
    %241 = vmatmul.mubr.bf16.gmra.mrb[0].mxu0 %v136
    %v242 = vpop.f32.mrb[0].mxu0
    %v243 = vadd.f32 %v158, %v242
    %v244 = vpop.f32.mrb[0].mxu0
    %v245 = vpop.f32.mrb[0].mxu0
    %v246 = vadd.f32 %v158, %v245
    %v247 = vpop.f32.mrb[0].mxu0
    %248 = vdwg.mxu0
    %v249 = vxor.u32 %v243, 2147483648
    %v250 = vxor.u32 %v246, 2147483648
    %v251 = vmul.f32 %v249, 1.442695
    %v252 = vpow.pop %v251
    %v253 = vmul.f32 %v250, 1.442695
    %v254 = vpow.pop %v253
    %v255 = vadd.f32 %v252, 1.0
    %v256 = vadd.f32 %v254, 1.0
    %v257 = vrcp.pop %v255
    %v258 = vmul.f32 1.0, %v257
    %v259 = vrcp.pop %v256
    %v260 = vmul.f32 1.0, %v259
    %v261 = vpack.c.bf16 %v260, %v258
    %v263 = vunpack.c.l.b16 %v261
    %v264 = vunpack.c.h.b16 %v261
    %v265 = vpack.c.b16 %v263, %v263
    %v266 = vpack.c.b16 %v264, %v264
    %269 = vst [vmem:[#allocation8] sm:$0xf] %v265
    %270 = vst [vmem:[#allocation8 + $0x4] sm:$0xf] %v266
    // Predicated region
    $region34: #{tpu_custom_call.1} parent=1 // pred_check
      _
    $region35: #{tpu_custom_call.1} parent=1 // pred_check_branch
      %272 = sbr.rel (0) target = $region37
    $region36: #{tpu_custom_call.1} parent=1 // pred_region
      %s274 = ssub.s32 128, 128
      %275 = vsyncadd [#allocation4], %s274
      %s276 = sshll.u32 [#allocation8], 4
      %s277 = int_to_ptr.vmem [resolvable:$true] %s276
      %282 = dma.vmem_to_hbm [thread:$0]  %s277, 128, %s5, [#allocation4], 64, 64, 4
    $region37: #{tpu_custom_call.1} parent=1 // pred_fallthru
      _
    // Predicated region
    $region38: #{tpu_custom_call.1} parent=1 // pred_check
      _
    $region39: #{tpu_custom_call.1} parent=1 // pred_check_branch
      %284 = sbr.rel (0) target = $region41
    $region40: #{tpu_custom_call.1} parent=1 // pred_region
      %285 = dma.done [#allocation4], 128
    $region41: #{tpu_custom_call.1} parent=1 // pred_fallthru
      _
    %286 = vsyncpa [#allocation3], 1
    %287 = vsyncpa [#allocation6], 1
    %288 = vsyncpa [#allocation4], 1

</llo_original>
